<compile_context>
chip_gen: v6e
topology: v6e:2x2x1
jax: 0.10.0
libtpu: 0.0.40
codegen_flags: <defaults>
</compile_context>

<pallas_src>
import numpy as np
import jax
import jax.numpy as jnp
from jax import lax
from jax.experimental import pallas as pl
from jax.experimental.pallas import tpu as pltpu

# ---------------- module configuration ----------------
IN_CHANNELS = 4
CHANNELS = 4
KERNEL = 3
PADDING = 1
STRIDE = 1          # kernel implemented for stride=1, dilation=1 (module config)
RADIX = 2
CARDINALITY = 1     # == `groups`
REDUCTION_FACTOR = 4
INTER = max(IN_CHANNELS * RADIX // REDUCTION_FACTOR, 32)   # = 32
RCHANNELS = CHANNELS * RADIX                               # = 8

B = 2
D = H = W = 8
DHW = D * H * W                                            # 512 (stride=1, pad=1 conv)
K3C = KERNEL ** 3 * IN_CHANNELS                            # 108
KPAD = 112                                                 # 108 -> next multiple of 16; row 108 = ones (bias)

FC_ROWS = INTER + RCHANNELS                                # 40
FC_COLS = INTER + 1                                        # 33


# ---------------- fused kernel (one grid step == one batch sample) ----------------
def _splat_fused_kernel(p_ref, wT_ref, fc_ref, out_ref):
    # p_ref:   (KPAD, DHW)      bf16 im2col patches for this batch (row 108 == 1.0 bias row)
    # wT_ref:  (RCHANNELS, KPAD) bf16 conv weight, group structure baked in, bias in col 108
    # fc_ref:  (FC_ROWS, FC_COLS) f32 packed fc params:
    #            [0:INTER, 0:CHANNELS]  = w1^T   [0:INTER, CHANNELS]  = b1
    #            [INTER:,  0:INTER]     = w2^T   [INTER:,  INTER]     = b2  (rSoftMax-permuted)
    # out_ref: (1, CHANNELS, DHW) f32 lane-dense output block for this batch
    S = DHW

    # grouped conv3d + bias (folded) + ReLU: ONE lane-dense MXU matmul (8,112)@(112,512)
    y = jnp.dot(wT_ref[...], p_ref[...], preferred_element_type=jnp.float32)   # (RCHANNELS, S) f32
    y = jnp.maximum(y, 0.0)

    # global average pool (single lane reduce) + radix sum -> (CHANNELS, 1)
    gap = jnp.sum(y, axis=1, keepdims=True) * (1.0 / S)                         # (RCHANNELS, 1)
    gap = gap[:CHANNELS, :] + gap[CHANNELS:, :]                                 # (CHANNELS, 1)

    # fc1 + ReLU + fc2 (tiny serial MXU dots — accepted)
    w1T = fc_ref[0:INTER, 0:CHANNELS]                                           # (INTER, CHANNELS)
    b1 = fc_ref[0:INTER, CHANNELS:CHANNELS + 1]                                 # (INTER, 1)
    w2T = fc_ref[INTER:INTER + RCHANNELS, 0:INTER]                              # (RCHANNELS, INTER)
    b2 = fc_ref[INTER:INTER + RCHANNELS, INTER:INTER + 1]                       # (RCHANNELS, 1)
    h = jnp.maximum(jnp.dot(w1T, gap, preferred_element_type=jnp.float32) + b1, 0.0)
    logits = jnp.dot(w2T, h, preferred_element_type=jnp.float32) + b2           # (RCHANNELS, 1)

    # rSoftMax across radix chunks (rows already permuted to [radix, card, ch] order)
    if RADIX > 1:
        chunks = [logits[r * CHANNELS:(r + 1) * CHANNELS, :] for r in range(RADIX)]
        m = chunks[0]
        for c in chunks[1:]:
            m = jnp.maximum(m, c)
        exps = [jnp.exp(c - m) for c in chunks]
        den = exps[0]
        for e in exps[1:]:
            den = den + e
        attens = [e / den for e in exps]                                        # each (CHANNELS, 1)
    else:
        attens = [1.0 / (1.0 + jnp.exp(-logits))]                               # sigmoid branch

    # attention apply + radix sum; direct lane-dense store (no concatenate)
    out = y[0:CHANNELS, :] * attens[0]
    for r in range(1, RADIX):
        out = out + y[r * CHANNELS:(r + 1) * CHANNELS, :] * attens[r]           # (CHANNELS, S)
    out_ref[...] = out.reshape(out_ref.shape).astype(out_ref.dtype)


# ---------------- wrapper ----------------
def splat_conv3d(x_ncdhw, wT, fc_slab):
    """NCDHW in, NCDHW out. Light XLA prep (no large transpose), one fused pallas_call."""
    Bn, Cin, Dd, Hh, Ww = x_ncdhw.shape
    if (Cin, Dd, Hh, Ww) != (IN_CHANNELS, D, H, W):
        raise ValueError("splat_conv3d is specialized to "
                         f"(*, {IN_CHANNELS}, {D}, {H}, {W}); got {x_ncdhw.shape}")

    # im2col directly in (K, B*DHW) layout: ONE small channels-major transpose (~16 KB),
    # then 27 contiguous slabs; the contraction-row order matches wT's row order by prep.
    x_cm = jnp.transpose(x_ncdhw, (1, 0, 2, 3, 4)).astype(jnp.bfloat16)         # (Cin, B, D, H, W)
    x_cm = jnp.pad(x_cm, ((0, 0), (0, 0), (PADDING, PADDING),
                          (PADDING, PADDING), (PADDING, PADDING)))
    M = Bn * DHW
    slabs = []
    for kd in range(KERNEL):
        for kh in range(KERNEL):
            for kw in range(KERNEL):
                slabs.append(x_cm[:, :, kd:kd + D, kh:kh + H, kw:kw + W]
                             .reshape(IN_CHANNELS, M))
    slabs.append(jnp.ones((1, M), jnp.bfloat16))                 # bias row (conv bias folded into wT)
    slabs.append(jnp.zeros((KPAD - K3C - 1, M), jnp.bfloat16))   # pad contraction 109 -> 112
    patches = jnp.concatenate(slabs, axis=0)                     # (KPAD, B*DHW) bf16

    out = pl.pallas_call(
        _splat_fused_kernel,
        out_shape=jax.ShapeDtypeStruct((Bn, CHANNELS, DHW), jnp.float32),
        grid=(Bn,),
        in_specs=[
            pl.BlockSpec((KPAD, DHW), lambda b: (0, b)),          # per-batch patch columns
            pl.BlockSpec((RCHANNELS, KPAD), lambda b: (0, 0)),    # conv weight (resident)
            pl.BlockSpec((FC_ROWS, FC_COLS), lambda b: (0, 0)),   # packed fc params (resident)
        ],
        out_specs=pl.BlockSpec((1, CHANNELS, DHW), lambda b: (b, 0, 0)),
        compiler_params=pltpu.CompilerParams(dimension_semantics=("parallel",)),
    )(patches, wT, fc_slab)

    return out.reshape(Bn, CHANNELS, D, H, W)


# ---------------- deterministic parameter construction (PyTorch shapes) ----------------
def init_params(key):
    kc, kcb, k1, k1b, k2, k2b = jax.random.split(key, 6)
    G = CARDINALITY * RADIX
    cin_g = IN_CHANNELS // G
    w_conv_pt = jax.random.normal(kc, (RCHANNELS, cin_g, KERNEL, KERNEL, KERNEL),
                                  jnp.float32) * 0.1
    b_conv = jax.random.normal(kcb, (RCHANNELS,), jnp.float32) * 0.1
    w1_pt = jax.random.normal(k1, (INTER, CHANNELS // CARDINALITY), jnp.float32) * 0.1
    b1 = jax.random.normal(k1b, (INTER,), jnp.float32) * 0.1
    w2_pt = jax.random.normal(k2, (RCHANNELS, INTER // CARDINALITY), jnp.float32) * 0.1
    b2 = jax.random.normal(k2b, (RCHANNELS,), jnp.float32) * 0.1
    return w_conv_pt, b_conv, w1_pt, b1, w2_pt, b2


def densify(w_conv_pt, w1_pt, w2_pt, b2):
    """Expand grouped weights to dense (zero outside group blocks) and permute fc2
    output channels into [radix, cardinality, ch_per] order (rSoftMax layout)."""
    G = CARDINALITY * RADIX
    cin_g = IN_CHANNELS // G
    cout_g = RCHANNELS // G
    w_dense = jnp.zeros((KERNEL, KERNEL, KERNEL, IN_CHANNELS, RCHANNELS), jnp.float32)
    for g in range(G):
        blk = jnp.transpose(w_conv_pt[g * cout_g:(g + 1) * cout_g], (2, 3, 4, 1, 0))
        w_dense = w_dense.at[:, :, :, g * cin_g:(g + 1) * cin_g,
                             g * cout_g:(g + 1) * cout_g].set(blk)

    in1, out1 = CHANNELS // CARDINALITY, INTER // CARDINALITY
    w1_dense = jnp.zeros((CHANNELS, INTER), jnp.float32)
    for c in range(CARDINALITY):
        w1_dense = w1_dense.at[c * in1:(c + 1) * in1, c * out1:(c + 1) * out1].set(
            w1_pt[c * out1:(c + 1) * out1].T)

    in2, out2 = INTER // CARDINALITY, RCHANNELS // CARDINALITY
    w2_dense = jnp.zeros((INTER, RCHANNELS), jnp.float32)
    for c in range(CARDINALITY):
        w2_dense = w2_dense.at[c * in2:(c + 1) * in2, c * out2:(c + 1) * out2].set(
            w2_pt[c * out2:(c + 1) * out2].T)

    chper = CHANNELS // CARDINALITY
    perm = np.zeros(RCHANNELS, dtype=np.int32)
    for r in range(RADIX):
        for c in range(CARDINALITY):
            for j in range(chper):
                new = r * CHANNELS + c * chper + j
                old = c * RADIX * chper + r * chper + j
                perm[new] = old
    w2_perm = w2_dense[:, perm]
    b2_perm = b2[perm]
    return w_dense, w1_dense, w2_dense, w2_perm, b2_perm


def prepare_kernel_params(w_conv_pt, b_conv, w1_pt, b1, w2_pt, b2):
    """Produce the bf16 conv weight (bias folded) and the packed f32 fc param slab."""
    w_dense, w1_dense, w2_dense, w2_perm, b2_perm = densify(w_conv_pt, w1_pt, w2_pt, b2)
    w_flat = w_dense.reshape(K3C, RCHANNELS)             # row = ((kd*3+kh)*3+kw)*Cin + cin
    wT = jnp.zeros((RCHANNELS, KPAD), jnp.float32)
    wT = wT.at[:, :K3C].set(w_flat.T)
    wT = wT.at[:, K3C].set(b_conv)                       # matches the ones-row of patches
    wT = wT.astype(jnp.bfloat16)

    fc_slab = jnp.zeros((FC_ROWS, FC_COLS), jnp.float32)
    fc_slab = fc_slab.at[:INTER, :CHANNELS].set(w1_dense.T)      # (32, 4)
    fc_slab = fc_slab.at[:INTER, CHANNELS].set(b1)               # (32,)
    fc_slab = fc_slab.at[INTER:, :INTER].set(w2_perm.T)          # (8, 32)  permuted rows
    fc_slab = fc_slab.at[INTER:, INTER].set(b2_perm)             # (8,)
    return (wT, fc_slab), (w1_dense, w2_dense)


# ---------------- pure-JAX reference (mirrors the PyTorch forward) ----------------
def reference_forward(x_ncdhw, w_conv_pt, b_conv, w1_dense, b1, w2_dense, b2):
    G = CARDINALITY * RADIX
    y = lax.conv_general_dilated(
        x_ncdhw, w_conv_pt, window_strides=(STRIDE,) * 3,
        padding=[(PADDING, PADDING)] * 3,
        dimension_numbers=("NCDHW", "OIDHW", "NCDHW"),
        feature_group_count=G, precision=lax.Precision.HIGHEST)
    y = y + b_conv[None, :, None, None, None]
    y = jnp.maximum(y, 0.0)
    splits = [y[:, r * CHANNELS:(r + 1) * CHANNELS] for r in range(RADIX)]
    gap = sum(splits).mean(axis=(2, 3, 4))                   # (B, channels)
    h = jnp.maximum(gap @ w1_dense + b1, 0.0)
    logits = h @ w2_dense + b2                               # (B, channels*radix)
    if RADIX > 1:
        chper = CHANNELS // CARDINALITY
        lg = logits.reshape(-1, CARDINALITY, RADIX, chper).transpose(0, 2, 1, 3)
        at = jax.nn.softmax(lg, axis=1).reshape(logits.shape[0], -1)
    else:
        at = jax.nn.sigmoid(logits)
    attens = [at[:, r * CHANNELS:(r + 1) * CHANNELS] for r in range(RADIX)]
    out = sum(a[:, :, None, None, None] * s for a, s in zip(attens, splits))
    return out


if __name__ == "__main__":
    key = jax.random.PRNGKey(0)
    kx, kp = jax.random.split(key)
    x_ncdhw = jax.random.normal(kx, (B, IN_CHANNELS, D, H, W), jnp.float32)
    w_conv_pt, b_conv, w1_pt, b1, w2_pt, b2 = init_params(kp)
    (wT, fc_slab), (w1_dense, w2_dense) = prepare_kernel_params(
        w_conv_pt, b_conv, w1_pt, b1, w2_pt, b2)

    out = jax.jit(splat_conv3d)(x_ncdhw, wT, fc_slab)
    out = jax.block_until_ready(out)

    ref = reference_forward(x_ncdhw, w_conv_pt, b_conv, w1_dense, b1, w2_dense, b2)
    max_err = float(jnp.max(jnp.abs(out - ref)))
    # tolerance covers bf16 MXU operands (f32 accumulation) vs. HIGHEST-precision f32 reference
    assert jnp.allclose(out, ref, atol=2e-2, rtol=2e-2), max_err
    print("KERNEL_OK")
</pallas_src>

<mosaic_0001>
module attributes {stable_mosaic.version = 11 : i64} {
  func.func @_splat_fused_kernel(%arg0: i32, %arg1: memref<112x512xbf16, #tpu.memory_space<vmem>>, %arg2: memref<8x112xbf16, #tpu.memory_space<vmem>>, %arg3: memref<40x33xf32, #tpu.memory_space<vmem>>, %arg4: memref<1x4x512xf32, #tpu.memory_space<vmem>>) attributes {dimension_semantics = [#tpu.dimension_semantics<parallel>], iteration_bounds = array<i64: 2>, scalar_prefetch = 0 : i64, scratch_operands = 0 : i64, tpu.core_type = #tpu.core_type<tc>, window_params = [{transform_indices = @transform_0, window_bounds = array<i64: 112, 512>}, {pipeline_mode = #tpu.pipeline_mode<synchronous>, transform_indices = @transform_1, window_bounds = array<i64: 8, 112>}, {pipeline_mode = #tpu.pipeline_mode<synchronous>, transform_indices = @transform_2, window_bounds = array<i64: 40, 33>}, {transform_indices = @transform_3, window_bounds = array<i64: 1, 4, 512>}]} {
    %c0 = arith.constant 0 : index
    %c0_0 = arith.constant 0 : index
    %0 = vector.load %arg2[%c0, %c0_0] : memref<8x112xbf16, #tpu.memory_space<vmem>>, vector<8x112xbf16>
    %c0_1 = arith.constant 0 : index
    %c0_2 = arith.constant 0 : index
    %1 = vector.load %arg1[%c0_1, %c0_2] : memref<112x512xbf16, #tpu.memory_space<vmem>>, vector<112x512xbf16>
    %cst = arith.constant dense<0.000000e+00> : vector<8x512xf32>
    %2 = tpu.matmul %0, %1, %cst {dimension_numbers = #tpu.dot_dimension_numbers<[1], [0], [0], [1], [0, 0, 1, 1], [], []>} : vector<8x112xbf16>, vector<112x512xbf16>, vector<8x512xf32> -> vector<8x512xf32>
    %cst_3 = arith.constant 0.000000e+00 : f32
    %3 = vector.broadcast %cst_3 : f32 to vector<8x512xf32>
    %4 = arith.maximumf %2, %3 : vector<8x512xf32>
    %cst_4 = arith.constant dense<0.000000e+00> : vector<8xf32>
    %5 = vector.multi_reduction <add>, %4, %cst_4 [1] : vector<8x512xf32> to vector<8xf32>
    %6 = vector.shape_cast %5 : vector<8xf32> to vector<8x1xf32>
    %cst_5 = arith.constant 0.001953125 : f32
    %7 = vector.broadcast %cst_5 : f32 to vector<8x1xf32>
    %8 = arith.mulf %6, %7 : vector<8x1xf32>
    %9 = vector.extract_strided_slice %8 {offsets = [0, 0], sizes = [4, 1], strides = [1, 1]} : vector<8x1xf32> to vector<4x1xf32>
    %10 = vector.extract_strided_slice %8 {offsets = [4, 0], sizes = [4, 1], strides = [1, 1]} : vector<8x1xf32> to vector<4x1xf32>
    %11 = arith.addf %9, %10 : vector<4x1xf32>
    %c0_6 = arith.constant 0 : index
    %c0_7 = arith.constant 0 : index
    %12 = vector.load %arg3[%c0_6, %c0_7] : memref<40x33xf32, #tpu.memory_space<vmem>>, vector<32x4xf32>
    %c0_8 = arith.constant 0 : index
    %c4 = arith.constant 4 : index
    %13 = vector.load %arg3[%c0_8, %c4] : memref<40x33xf32, #tpu.memory_space<vmem>>, vector<32x1xf32>
    %c32 = arith.constant 32 : index
    %c0_9 = arith.constant 0 : index
    %14 = vector.load %arg3[%c32, %c0_9] : memref<40x33xf32, #tpu.memory_space<vmem>>, vector<8x32xf32>
    %c32_10 = arith.constant 32 : index
    %c32_11 = arith.constant 32 : index
    %15 = vector.load %arg3[%c32_10, %c32_11] : memref<40x33xf32, #tpu.memory_space<vmem>>, vector<8x1xf32>
    %cst_12 = arith.constant dense<0.000000e+00> : vector<32x1xf32>
    %16 = tpu.matmul %12, %11, %cst_12 {dimension_numbers = #tpu.dot_dimension_numbers<[1], [0], [0], [1], [0, 0, 1, 1], [], []>} : vector<32x4xf32>, vector<4x1xf32>, vector<32x1xf32> -> vector<32x1xf32>
    %17 = arith.addf %16, %13 : vector<32x1xf32>
    %cst_13 = arith.constant 0.000000e+00 : f32
    %18 = vector.broadcast %cst_13 : f32 to vector<32x1xf32>
    %19 = arith.maximumf %17, %18 : vector<32x1xf32>
    %cst_14 = arith.constant dense<0.000000e+00> : vector<8x1xf32>
    %20 = tpu.matmul %14, %19, %cst_14 {dimension_numbers = #tpu.dot_dimension_numbers<[1], [0], [0], [1], [0, 0, 1, 1], [], []>} : vector<8x32xf32>, vector<32x1xf32>, vector<8x1xf32> -> vector<8x1xf32>
    %21 = arith.addf %20, %15 : vector<8x1xf32>
    %22 = vector.extract_strided_slice %21 {offsets = [0, 0], sizes = [4, 1], strides = [1, 1]} : vector<8x1xf32> to vector<4x1xf32>
    %23 = vector.extract_strided_slice %21 {offsets = [4, 0], sizes = [4, 1], strides = [1, 1]} : vector<8x1xf32> to vector<4x1xf32>
    %24 = arith.maximumf %22, %23 : vector<4x1xf32>
    %25 = arith.subf %22, %24 : vector<4x1xf32>
    %26 = math.exp %25 : vector<4x1xf32>
    %27 = arith.subf %23, %24 : vector<4x1xf32>
    %28 = math.exp %27 : vector<4x1xf32>
    %29 = arith.addf %26, %28 : vector<4x1xf32>
    %30 = arith.divf %26, %29 : vector<4x1xf32>
    %31 = arith.divf %28, %29 : vector<4x1xf32>
    %32 = vector.extract_strided_slice %4 {offsets = [0, 0], sizes = [4, 512], strides = [1, 1]} : vector<8x512xf32> to vector<4x512xf32>
    %33 = vector.broadcast %30 : vector<4x1xf32> to vector<4x512xf32>
    %34 = arith.mulf %32, %33 : vector<4x512xf32>
    %35 = vector.extract_strided_slice %4 {offsets = [4, 0], sizes = [4, 512], strides = [1, 1]} : vector<8x512xf32> to vector<4x512xf32>
    %36 = vector.broadcast %31 : vector<4x1xf32> to vector<4x512xf32>
    %37 = arith.mulf %35, %36 : vector<4x512xf32>
    %38 = arith.addf %34, %37 : vector<4x512xf32>
    %39 = vector.shape_cast %38 : vector<4x512xf32> to vector<1x4x512xf32>
    %c0_15 = arith.constant 0 : index
    %c0_16 = arith.constant 0 : index
    %c0_17 = arith.constant 0 : index
    %40 = vector.load %arg4[%c0_15, %c0_16, %c0_17] : memref<1x4x512xf32, #tpu.memory_space<vmem>>, vector<1x4x512xf32>
    tpu.vector_store %arg4[%c0_15, %c0_16, %c0_17], %39 {strides = array<i32>} : memref<1x4x512xf32, #tpu.memory_space<vmem>>, vector<1x4x512xf32>,
    return
  }
  func.func @transform_0(%arg0: i32) -> (i32, i32) {
    %c0_i32 = arith.constant 0 : i32
    %c0_i32_0 = arith.constant 0 : i32
    return %c0_i32, %arg0 : i32, i32
  }
  func.func @transform_1(%arg0: i32) -> (i32, i32) {
    %c0_i32 = arith.constant 0 : i32
    %c0_i32_0 = arith.constant 0 : i32
    %c0_i32_1 = arith.constant 0 : i32
    return %c0_i32, %c0_i32_0 : i32, i32
  }
  func.func @transform_2(%arg0: i32) -> (i32, i32) {
    %c0_i32 = arith.constant 0 : i32
    %c0_i32_0 = arith.constant 0 : i32
    %c0_i32_1 = arith.constant 0 : i32
    return %c0_i32, %c0_i32_0 : i32, i32
  }
  func.func @transform_3(%arg0: i32) -> (i32, i32, i32) {
    %c0_i32 = arith.constant 0 : i32
    %c0_i32_0 = arith.constant 0 : i32
    %c0_i32_1 = arith.constant 0 : i32
    return %arg0, %c0_i32, %c0_i32_0 : i32, i32, i32
  }
}

</mosaic_0001>

<llo_original>
// kernel: splat_conv3d.1
$region0: #{splat_conv3d.1}
  #allocation0 [shape = 'u32[]', space=smem, size = 0x4, offset = 0x4, fixed_abs, tag = 'smem constant byte address 0x4 - core index']
  #allocation1 [shape = 'u32[144,128]{1,0:T(1,128)}', space=vmem, size = 0x12000, scoped, tag = 'internal scratch']
  %s0 = inlined_call_operand.vmem [shape: bf16[112,1024], index: 0, kind: input, shape index: {}]
  %s1 = inlined_call_operand.vmem [shape: bf16[8,112], index: 1, kind: input, shape index: {}]
  %s2 = inlined_call_operand.vmem [shape: f32[40,33], index: 2, kind: input, shape index: {}]
  %s3 = inlined_call_operand.vmem [shape: f32[2,4,512], index: 3, kind: output, shape index: {}]
  %s4 = sld [smem:[#allocation0]]
  $region68: #{splat_conv3d.1} parent=0
    _
  %s6 = ssub.s32 1, %s4
  %s7 = scalar_select 0, %s6, %s4
  $region1: #{splat_conv3d.1} parent=0
    #allocation2 [shape = 'u8[229376]{0}', space=vmem, size = 0x38000, scoped, tag = 'input window, operand 0']
    loop: start=0, step=1, limit=4
    $region2: #{splat_conv3d.1} parent=1 // loop_pre_header
      _
    $region3: #{splat_conv3d.1} parent=1 // loop_header
      %s9 = sphi 0, %s13
      %p10 = scmp.ge.s32.totalorder %s9, 4
      %s19 = sphi 0, %s21
      %s22 = sphi 0, %s19
      %s23 = sphi 0, %s22
      %s39 = sphi 0, %s23
      %s43 = sphi 0, %s43
      %s45 = sphi 0, %s43
      %s46 = sphi 0, %s45
      %s60 = sphi 0, %s46
      %s64 = sphi 0, %s64
      %s66 = sphi 0, %s64
      %s67 = sphi 0, %s66
      %s81 = sphi 0, %s67
      %s87 = sphi 0, %s89
      %s90 = sphi 0, %s87
      %s91 = sphi 0, %s90
      %s107 = sphi 0, %s91
    $region4: #{splat_conv3d.1} parent=1 // loop_header_branch
      %12 = sbr.rel (%p10) target = $region8
    $region5: #{splat_conv3d.1} parent=1 // loop_body
      %s14 = ssub.s32 %s9, 1
      %s15 = ssub.s32 %s9, 2
      %s16 = sadd.s32 %s9, 1
      %s17 = ssub.s32 %s9, %s16
      %p18 = scmp.eq.s32.totalorder %s17, 0
      %s20 = sadd.s32 %s19, 1
      %s21 = scalar_select %p18, %s19, %s20
      %p24 = pneg %p18
      %p25 = scmp.eq.s32.totalorder %s9, 1
      %p26 = por %p24, %p25
      %p27 = scmp.ne.s32.totalorder %s19, %s22
      %p28 = scmp.eq.s32.totalorder %s9, 0
      %p29 = por %p27, %p28
      %p30 = scmp.ne.s32.totalorder %s19, %s22
      %p31 = scmp.eq.s32.totalorder %s14, 1
      %p32 = por %p30, %p31
      %p33 = scmp.ne.s32.totalorder %s22, %s23
      %p34 = scmp.eq.s32.totalorder %s14, 0
      %p35 = por %p33, %p34
      %p36 = scmp.ne.s32.totalorder %s22, %s23
      %p37 = scmp.eq.s32.totalorder %s15, 1
      %p38 = por %p36, %p37
      %p40 = scmp.ne.s32.totalorder %s23, %s39
      %p41 = scmp.eq.s32.totalorder %s15, 0
      %p42 = por %p40, %p41
      %s44 = sadd.s32 %s43, 1
      %p47 = scmp.eq.s32.totalorder %s9, 1
      %p48 = scmp.ne.s32.totalorder %s43, %s45
      %p49 = scmp.eq.s32.totalorder %s9, 0
      %p50 = por %p48, %p49
      %p51 = scmp.ne.s32.totalorder %s43, %s45
      %p52 = scmp.eq.s32.totalorder %s14, 1
      %p53 = por %p51, %p52
      %p54 = scmp.ne.s32.totalorder %s45, %s46
      %p55 = scmp.eq.s32.totalorder %s14, 0
      %p56 = por %p54, %p55
      %p57 = scmp.ne.s32.totalorder %s45, %s46
      %p58 = scmp.eq.s32.totalorder %s15, 1
      %p59 = por %p57, %p58
      %p61 = scmp.ne.s32.totalorder %s46, %s60
      %p62 = scmp.eq.s32.totalorder %s15, 0
      %p63 = por %p61, %p62
      %s65 = sadd.s32 %s64, 1
      %p68 = scmp.eq.s32.totalorder %s9, 1
      %p69 = scmp.ne.s32.totalorder %s64, %s66
      %p70 = scmp.eq.s32.totalorder %s9, 0
      %p71 = por %p69, %p70
      %p72 = scmp.ne.s32.totalorder %s64, %s66
      %p73 = scmp.eq.s32.totalorder %s14, 1
      %p74 = por %p72, %p73
      %p75 = scmp.ne.s32.totalorder %s66, %s67
      %p76 = scmp.eq.s32.totalorder %s14, 0
      %p77 = por %p75, %p76
      %p78 = scmp.ne.s32.totalorder %s66, %s67
      %p79 = scmp.eq.s32.totalorder %s15, 1
      %p80 = por %p78, %p79
      %p82 = scmp.ne.s32.totalorder %s67, %s81
      %p83 = scmp.eq.s32.totalorder %s15, 0
      %p84 = por %p82, %p83
      %s85 = ssub.s32 %s9, %s16
      %p86 = scmp.eq.s32.totalorder %s85, 0
      %s88 = sadd.s32 %s87, 1
      %s89 = scalar_select %p86, %s87, %s88
      %p92 = pneg %p86
      %p93 = scmp.eq.s32.totalorder %s9, 1
      %p94 = por %p92, %p93
      %p95 = scmp.ne.s32.totalorder %s87, %s90
      %p96 = scmp.eq.s32.totalorder %s9, 0
      %p97 = por %p95, %p96
      %p98 = scmp.ne.s32.totalorder %s87, %s90
      %p99 = scmp.eq.s32.totalorder %s14, 1
      %p100 = por %p98, %p99
      %p101 = scmp.ne.s32.totalorder %s90, %s91
      %p102 = scmp.eq.s32.totalorder %s14, 0
      %p103 = por %p101, %p102
      %p104 = scmp.ne.s32.totalorder %s90, %s91
      %p105 = scmp.eq.s32.totalorder %s15, 1
      %p106 = por %p104, %p105
      %p108 = scmp.ne.s32.totalorder %s91, %s107
      %p109 = scmp.eq.s32.totalorder %s15, 0
      %p110 = por %p108, %p109
      %p111 = scmp.le.s32.totalorder 1, %s9
      %p112 = scmp.lt.s32.totalorder %s9, 3
      %p113 = pnand %p111, %p112
      %p114 = pneg %p113
      // Predicated region
      $region9: #{splat_conv3d.1} parent=5 // pred_check
        _
      $region10: #{splat_conv3d.1} parent=5 // pred_check_branch
        %116 = sbr.rel (%p113) target = $region12
      $region11: #{splat_conv3d.1} parent=5 // pred_region
        %s117 = ssub.s32 %s9, 1
        // Predicated region
        $region13: #{splat_conv3d.1} parent=11 // pred_check
          %p118 = pneg %p56
        $region14: #{splat_conv3d.1} parent=11 // pred_check_branch
          %120 = sbr.rel (%p118) target = $region16
        $region15: #{splat_conv3d.1} parent=11 // pred_region
          _
        $region16: #{splat_conv3d.1} parent=11 // pred_fallthru
          _
        // Predicated region
        $region17: #{splat_conv3d.1} parent=11 // pred_check
          %p121 = pneg %p77
        $region18: #{splat_conv3d.1} parent=11 // pred_check_branch
          %123 = sbr.rel (%p121) target = $region20
        $region19: #{splat_conv3d.1} parent=11 // pred_region
          _
        $region20: #{splat_conv3d.1} parent=11 // pred_fallthru
          _
      $region12: #{splat_conv3d.1} parent=5 // pred_fallthru
        _
      %p124 = scmp.lt.s32.totalorder %s9, 2
      // Predicated region
      $region21: #{splat_conv3d.1} parent=5 // pred_check
        %p125 = pneg %p124
      $region22: #{splat_conv3d.1} parent=5 // pred_check_branch
        %127 = sbr.rel (%p125) target = $region24
      $region23: #{splat_conv3d.1} parent=5 // pred_region
        // Predicated region
        $region25: #{splat_conv3d.1} parent=23 // pred_check
          %p128 = pneg %p29
        $region26: #{splat_conv3d.1} parent=23 // pred_check_branch
          %130 = sbr.rel (%p128) target = $region28
        $region27: #{splat_conv3d.1} parent=23 // pred_region
          %s131 = sand.u32 %s19, 1
          %s132 = sand.u32 %s19, 1
          %s133 = smul.addr %s132, 224
          %s134 = scalar_lea.vmem [#allocation2], %s133
          %s135 = smul.u32 4, %s9
          %s136 = smul.addr %s135, 4
          %s137 = scalar_lea.vmem %s0, %s136
          // Predicated region
          $region29: #{splat_conv3d.1} parent=27 // pred_check
            _
          $region30: #{splat_conv3d.1} parent=27 // pred_check_branch
            %139 = sbr.rel (0) target = $region32
          $region31: #{splat_conv3d.1} parent=27 // pred_region
            // Predicated region
            $region33: #{splat_conv3d.1} parent=31 // pred_check
              _
            $region34: #{splat_conv3d.1} parent=31 // pred_check_branch
              %141 = sbr.rel (0) target = $region36
            $region35: #{splat_conv3d.1} parent=31 // pred_region
              loop: start=0, step=1, limit=1
              $region37: #{splat_conv3d.1} parent=35 // loop_pre_header
                _
              $region38: #{splat_conv3d.1} parent=35 // loop_header
                %s143 = sphi 0, %s147
                %p144 = scmp.ge.s32.totalorder %s143, 1
                %s148 = sphi %s137, %s137
                %s149 = sphi %s134, %s134
              $region39: #{splat_conv3d.1} parent=35 // loop_header_branch
                %146 = sbr.rel (%p144) target = $region43
              $region40: #{splat_conv3d.1} parent=35 // loop_body
                %v150 = vld [vmem:[%s148] sm:$0xff]
                %151 = vst [vmem:[%s149] sm:$0xff] %v150
                %v152 = vld [vmem:[%s148 + $0x8] sm:$0xff]
                %153 = vst [vmem:[%s149 + $0x8] sm:$0xff] %v152
                %v154 = vld [vmem:[%s148 + $0x20] sm:$0xff]
                %155 = vst [vmem:[%s149 + $0x10] sm:$0xff] %v154
                %v156 = vld [vmem:[%s148 + $0x28] sm:$0xff]
                %157 = vst [vmem:[%s149 + $0x18] sm:$0xff] %v156
                %v158 = vld [vmem:[%s148 + $0x40] sm:$0xff]
                %159 = vst [vmem:[%s149 + $0x20] sm:$0xff] %v158
                %v160 = vld [vmem:[%s148 + $0x48] sm:$0xff]
                %161 = vst [vmem:[%s149 + $0x28] sm:$0xff] %v160
                %v162 = vld [vmem:[%s148 + $0x60] sm:$0xff]
                %163 = vst [vmem:[%s149 + $0x30] sm:$0xff] %v162
                %v164 = vld [vmem:[%s148 + $0x68] sm:$0xff]
                %165 = vst [vmem:[%s149 + $0x38] sm:$0xff] %v164
                %v166 = vld [vmem:[%s148 + $0x80] sm:$0xff]
                %167 = vst [vmem:[%s149 + $0x40] sm:$0xff] %v166
                %v168 = vld [vmem:[%s148 + $0x88] sm:$0xff]
                %169 = vst [vmem:[%s149 + $0x48] sm:$0xff] %v168
                %v170 = vld [vmem:[%s148 + $0xa0] sm:$0xff]
                %171 = vst [vmem:[%s149 + $0x50] sm:$0xff] %v170
                %v172 = vld [vmem:[%s148 + $0xa8] sm:$0xff]
                %173 = vst [vmem:[%s149 + $0x58] sm:$0xff] %v172
                %v174 = vld [vmem:[%s148 + $0xc0] sm:$0xff]
                %175 = vst [vmem:[%s149 + $0x60] sm:$0xff] %v174
                %v176 = vld [vmem:[%s148 + $0xc8] sm:$0xff]
                %177 = vst [vmem:[%s149 + $0x68] sm:$0xff] %v176
                %v178 = vld [vmem:[%s148 + $0xe0] sm:$0xff]
                %179 = vst [vmem:[%s149 + $0x70] sm:$0xff] %v178
                %v180 = vld [vmem:[%s148 + $0xe8] sm:$0xff]
                %181 = vst [vmem:[%s149 + $0x78] sm:$0xff] %v180
                %v182 = vld [vmem:[%s148 + $0x100] sm:$0xff]
                %183 = vst [vmem:[%s149 + $0x80] sm:$0xff] %v182
                %v184 = vld [vmem:[%s148 + $0x108] sm:$0xff]
                %185 = vst [vmem:[%s149 + $0x88] sm:$0xff] %v184
                %v186 = vld [vmem:[%s148 + $0x120] sm:$0xff]
                %187 = vst [vmem:[%s149 + $0x90] sm:$0xff] %v186
                %v188 = vld [vmem:[%s148 + $0x128] sm:$0xff]
                %189 = vst [vmem:[%s149 + $0x98] sm:$0xff] %v188
                %v190 = vld [vmem:[%s148 + $0x140] sm:$0xff]
                %191 = vst [vmem:[%s149 + $0xa0] sm:$0xff] %v190
                %v192 = vld [vmem:[%s148 + $0x148] sm:$0xff]
                %193 = vst [vmem:[%s149 + $0xa8] sm:$0xff] %v192
                %v194 = vld [vmem:[%s148 + $0x160] sm:$0xff]
                %195 = vst [vmem:[%s149 + $0xb0] sm:$0xff] %v194
                %v196 = vld [vmem:[%s148 + $0x168] sm:$0xff]
                %197 = vst [vmem:[%s149 + $0xb8] sm:$0xff] %v196
                %v198 = vld [vmem:[%s148 + $0x180] sm:$0xff]
                %199 = vst [vmem:[%s149 + $0xc0] sm:$0xff] %v198
                %v200 = vld [vmem:[%s148 + $0x188] sm:$0xff]
                %201 = vst [vmem:[%s149 + $0xc8] sm:$0xff] %v200
                %v202 = vld [vmem:[%s148 + $0x1a0] sm:$0xff]
                %203 = vst [vmem:[%s149 + $0xd0] sm:$0xff] %v202
                %v204 = vld [vmem:[%s148 + $0x1a8] sm:$0xff]
                %205 = vst [vmem:[%s149 + $0xd8] sm:$0xff] %v204
              $region41: #{splat_conv3d.1} parent=35 // loop_footer
                %s147 = sadd.s32 1, %s143
              $region42: #{splat_conv3d.1} parent=35 // loop_footer_branch
                %142 = sbr.rel target = $region38
              $region43: #{splat_conv3d.1} parent=35 // loop_exit
                _
            $region36: #{splat_conv3d.1} parent=31 // pred_fallthru
              _
            // Predicated region
            $region44: #{splat_conv3d.1} parent=31 // pred_check
              _
            $region45: #{splat_conv3d.1} parent=31 // pred_check_branch
              %207 = sbr.rel target = $region47
            $region46: #{splat_conv3d.1} parent=31 // pred_region
              _
            $region47: #{splat_conv3d.1} parent=31 // pred_fallthru
              _
          $region32: #{splat_conv3d.1} parent=27 // pred_fallthru
            _
          %208 = vnop
        $region28: #{splat_conv3d.1} parent=23 // pred_fallthru
          _
      $region24: #{splat_conv3d.1} parent=5 // pred_fallthru
        _
      %p209 = scmp.le.s32.totalorder 1, %s9
      %p210 = scmp.lt.s32.totalorder %s9, 3
      %p211 = pnand %p209, %p210
      %p212 = pneg %p211
      // Predicated region
      $region48: #{splat_conv3d.1} parent=5 // pred_check
        _
      $region49: #{splat_conv3d.1} parent=5 // pred_check_branch
        %214 = sbr.rel (%p211) target = $region51
      $region50: #{splat_conv3d.1} parent=5 // pred_region
        %s215 = ssub.s32 %s9, 1
        %s216 = sand.u32 %s22, 1
        %s217 = sand.u32 %s22, 1
        %s218 = smul.addr %s217, 224
        %s219 = scalar_lea.vmem [#allocation2], %s218
        // Predicated region
        $region52: #{splat_conv3d.1} parent=50 // pred_check
          %p220 = pneg %p35
        $region53: #{splat_conv3d.1} parent=50 // pred_check_branch
          %222 = sbr.rel (%p220) target = $region55
        $region54: #{splat_conv3d.1} parent=50 // pred_region
          _
        $region55: #{splat_conv3d.1} parent=50 // pred_fallthru
          _
        %s223 = sand.u32 %s22, 1
        %s224 = sand.u32 %s22, 1
        %s225 = smul.addr %s224, 224
        %s226 = scalar_lea.vmem [#allocation2], %s225
        %p227 = pneg %p35
        %p228 = pneg %p32
        %p229 = pneg %p56
        %p230 = pneg %p53
        %p231 = pneg %p77
        %p232 = pneg %p74
        %p233 = pneg %p103
        %p234 = pneg %p100
        %p235 = scmp.lt.s32.totalorder %s14, 1
        %s236 = scalar_select %p235, %s14, 1
        %s237 = smul.addr %s236, 4
        %s238 = smul.addr %s237, 4
        %s239 = scalar_lea.vmem %s3, %s238
        %s240 = smul.u32 4, %s14
        %p241 = scmp.lt.s32.totalorder %s14, 1
        %s242 = scalar_select %p241, %s14, 1
        %s243 = smul.addr %s242, 4
        %s244 = smul.addr %s243, 4
        %s245 = scalar_lea.vmem %s3, %s244
        %v247 = vld [vmem:[%s1] sm:$0xf]
        %v248 = vld [vmem:[%s219] sm:$0xff]
        %v249 = vld [vmem:[%s219 + $0x8] sm:$0xff]
        %v250 = vld [vmem:[%s219 + $0x10] sm:$0xff]
        %v251 = vld [vmem:[%s219 + $0x18] sm:$0xff]
        %v252 = vld [vmem:[%s219 + $0x20] sm:$0xff]
        %v253 = vld [vmem:[%s219 + $0x28] sm:$0xff]
        %v254 = vld [vmem:[%s219 + $0x30] sm:$0xff]
        %v255 = vld [vmem:[%s219 + $0x38] sm:$0xff]
        %v256 = vld [vmem:[%s219 + $0x40] sm:$0xff]
        %v257 = vld [vmem:[%s219 + $0x48] sm:$0xff]
        %v258 = vld [vmem:[%s219 + $0x50] sm:$0xff]
        %v259 = vld [vmem:[%s219 + $0x58] sm:$0xff]
        %v260 = vld [vmem:[%s219 + $0x60] sm:$0xff]
        %v261 = vld [vmem:[%s219 + $0x68] sm:$0xff]
        %v262 = vld [vmem:[%s219 + $0x70] sm:$0xff]
        %v263 = vld [vmem:[%s219 + $0x78] sm:$0xff]
        %v264 = vld [vmem:[%s219 + $0x80] sm:$0xff]
        %v265 = vld [vmem:[%s219 + $0x88] sm:$0xff]
        %v266 = vld [vmem:[%s219 + $0x90] sm:$0xff]
        %v267 = vld [vmem:[%s219 + $0x98] sm:$0xff]
        %v268 = vld [vmem:[%s219 + $0xa0] sm:$0xff]
        %v269 = vld [vmem:[%s219 + $0xa8] sm:$0xff]
        %v270 = vld [vmem:[%s219 + $0xb0] sm:$0xff]
        %v271 = vld [vmem:[%s219 + $0xb8] sm:$0xff]
        %v272 = vld [vmem:[%s219 + $0xc0] sm:$0xff]
        %v273 = vld [vmem:[%s219 + $0xc8] sm:$0xff]
        %v274 = vld [vmem:[%s219 + $0xd0] sm:$0xff]
        %v275 = vld [vmem:[%s219 + $0xd8] sm:$0xff]
        %v304 = vunpack.c.l.b16 %v248
        %v305 = vunpack.c.h.b16 %v248
        %v306 = vunpack.c.l.b16 %v249
        %v307 = vunpack.c.h.b16 %v249
        %v308 = vunpack.c.l.b16 %v250
        %v309 = vunpack.c.h.b16 %v250
        %v310 = vunpack.c.l.b16 %v251
        %v311 = vunpack.c.h.b16 %v251
        %v312 = vunpack.c.l.b16 %v252
        %v313 = vunpack.c.h.b16 %v252
        %v314 = vunpack.c.l.b16 %v253
        %v315 = vunpack.c.h.b16 %v253
        %v316 = vunpack.c.l.b16 %v254
        %v317 = vunpack.c.h.b16 %v254
        %v318 = vunpack.c.l.b16 %v255
        %v319 = vunpack.c.h.b16 %v255
        %v320 = vunpack.c.l.b16 %v256
        %v321 = vunpack.c.h.b16 %v256
        %v322 = vunpack.c.l.b16 %v257
        %v323 = vunpack.c.h.b16 %v257
        %v324 = vunpack.c.l.b16 %v258
        %v325 = vunpack.c.h.b16 %v258
        %v326 = vunpack.c.l.b16 %v259
        %v327 = vunpack.c.h.b16 %v259
        %v328 = vunpack.c.l.b16 %v260
        %v329 = vunpack.c.h.b16 %v260
        %v330 = vunpack.c.l.b16 %v261
        %v331 = vunpack.c.h.b16 %v261
        %v332 = vunpack.c.l.b16 %v262
        %v333 = vunpack.c.h.b16 %v262
        %v334 = vunpack.c.l.b16 %v263
        %v335 = vunpack.c.h.b16 %v263
        %v336 = vunpack.c.l.b16 %v264
        %v337 = vunpack.c.h.b16 %v264
        %v338 = vunpack.c.l.b16 %v265
        %v339 = vunpack.c.h.b16 %v265
        %v340 = vunpack.c.l.b16 %v266
        %v341 = vunpack.c.h.b16 %v266
        %v342 = vunpack.c.l.b16 %v267
        %v343 = vunpack.c.h.b16 %v267
        %v344 = vunpack.c.l.b16 %v268
        %v345 = vunpack.c.h.b16 %v268
        %v346 = vunpack.c.l.b16 %v269
        %v347 = vunpack.c.h.b16 %v269
        %v348 = vunpack.c.l.b16 %v270
        %v349 = vunpack.c.h.b16 %v270
        %v350 = vunpack.c.l.b16 %v271
        %v351 = vunpack.c.h.b16 %v271
        %v352 = vunpack.c.l.b16 %v272
        %v353 = vunpack.c.h.b16 %v272
        %v354 = vunpack.c.l.b16 %v273
        %v355 = vunpack.c.h.b16 %v273
        %v356 = vunpack.c.l.b16 %v274
        %v357 = vunpack.c.h.b16 %v274
        %v358 = vunpack.c.l.b16 %v275
        %v359 = vunpack.c.h.b16 %v275
        %v360 = vpack.c.b16 %v308, %v304
        %v361 = vpack.c.b16 %v309, %v305
        %v362 = vpack.c.b16 %v310, %v306
        %v363 = vpack.c.b16 %v311, %v307
        %v364 = vpack.c.b16 %v316, %v312
        %v365 = vpack.c.b16 %v317, %v313
        %v366 = vpack.c.b16 %v318, %v314
        %v367 = vpack.c.b16 %v319, %v315
        %v368 = vpack.c.b16 %v324, %v320
        %v369 = vpack.c.b16 %v325, %v321
        %v370 = vpack.c.b16 %v326, %v322
        %v371 = vpack.c.b16 %v327, %v323
        %v372 = vpack.c.b16 %v332, %v328
        %v373 = vpack.c.b16 %v333, %v329
        %v374 = vpack.c.b16 %v334, %v330
        %v375 = vpack.c.b16 %v335, %v331
        %v376 = vpack.c.b16 %v340, %v336
        %v377 = vpack.c.b16 %v341, %v337
        %v378 = vpack.c.b16 %v342, %v338
        %v379 = vpack.c.b16 %v343, %v339
        %v380 = vpack.c.b16 %v348, %v344
        %v381 = vpack.c.b16 %v349, %v345
        %v382 = vpack.c.b16 %v350, %v346
        %v383 = vpack.c.b16 %v351, %v347
        %v384 = vpack.c.b16 %v356, %v352
        %v385 = vpack.c.b16 %v357, %v353
        %v386 = vpack.c.b16 %v358, %v354
        %v387 = vpack.c.b16 %v359, %v355
        %vm416 = vcmask 916480
        %v418 = vsel %vm416, %v247, 0
        %420 = vmatprep.subr.bf16.mxu0 0
        %421 = vmatpush1.bf16.msra.mxu0 0
        %422 = vmatprep.subr.bf16.mxu0 %v385
        %423 = vmatpush1.bf16.msra.mxu0 %v384
        %424 = vmatprep.subr.bf16.mxu0 %v381
        %425 = vmatpush1.bf16.msra.mxu0 %v380
        %426 = vmatprep.subr.bf16.mxu0 %v377
        %427 = vmatpush1.bf16.msra.mxu0 %v376
        %428 = vmatprep.subr.bf16.mxu0 %v373
        %429 = vmatpush1.bf16.msra.mxu0 %v372
        %430 = vmatprep.subr.bf16.mxu0 %v369
        %431 = vmatpush1.bf16.msra.mxu0 %v368
        %432 = vmatprep.subr.bf16.mxu0 %v365
        %433 = vmatpush1.bf16.msra.mxu0 %v364
        %434 = vmatprep.subr.bf16.mxu0 %v361
        %435 = vmatpush1.bf16.msra.mxu0 %v360
        %436 = vmatprep.subr.bf16.mxu0 0
        %437 = vmatpush2.bf16.msra.mxu0 0
        %438 = vmatprep.subr.bf16.mxu0 0
        %439 = vmatpush2.bf16.msra.mxu0 0
        %440 = vmatprep.subr.bf16.mxu0 0
        %441 = vmatpush2.bf16.msra.mxu0 0
        %442 = vmatprep.subr.bf16.mxu0 0
        %443 = vmatpush2.bf16.msra.mxu0 0
        %444 = vmatprep.subr.bf16.mxu0 0
        %445 = vmatpush2.bf16.msra.mxu0 0
        %446 = vmatprep.subr.bf16.mxu0 0
        %447 = vmatpush2.bf16.msra.mxu0 0
        %448 = vmatprep.subr.bf16.mxu0 0
        %449 = vmatpush2.bf16.msra.mxu0 0
        %450 = vmatprep.subr.bf16.mxu0 0
        %451 = vmatpush2.bf16.msra.mxu0 0
        %452 = vmatprep.mubr.bf16.mxu0 0
        %453 = vmatmul.mubr.bf16.gmra.mxu0 %v418
        %v454 = vpop.f32.mrf.mxu0
        %v455 = vadd.f32 0.0, %v454
        %v456 = vpop.f32.mrf.mxu0
        %v457 = vadd.f32 0.0, %v456
        %v458 = vpop.f32.mrf.mxu0
        %v459 = vpop.f32.mrf.mxu0
        %460 = vdwg.mxu0
        %461 = vmatprep.subr.bf16.mxu0 0
        %462 = vmatpush1.bf16.msra.mxu0 0
        %463 = vmatprep.subr.bf16.mxu0 %v387
        %464 = vmatpush1.bf16.msra.mxu0 %v386
        %465 = vmatprep.subr.bf16.mxu0 %v383
        %466 = vmatpush1.bf16.msra.mxu0 %v382
        %467 = vmatprep.subr.bf16.mxu0 %v379
        %468 = vmatpush1.bf16.msra.mxu0 %v378
        %469 = vmatprep.subr.bf16.mxu0 %v375
        %470 = vmatpush1.bf16.msra.mxu0 %v374
        %471 = vmatprep.subr.bf16.mxu0 %v371
        %472 = vmatpush1.bf16.msra.mxu0 %v370
        %473 = vmatprep.subr.bf16.mxu0 %v367
        %474 = vmatpush1.bf16.msra.mxu0 %v366
        %475 = vmatprep.subr.bf16.mxu0 %v363
        %476 = vmatpush1.bf16.msra.mxu0 %v362
        %477 = vmatprep.subr.bf16.mxu0 0
        %478 = vmatpush2.bf16.msra.mxu0 0
        %479 = vmatprep.subr.bf16.mxu0 0
        %480 = vmatpush2.bf16.msra.mxu0 0
        %481 = vmatprep.subr.bf16.mxu0 0
        %482 = vmatpush2.bf16.msra.mxu0 0
        %483 = vmatprep.subr.bf16.mxu0 0
        %484 = vmatpush2.bf16.msra.mxu0 0
        %485 = vmatprep.subr.bf16.mxu0 0
        %486 = vmatpush2.bf16.msra.mxu0 0
        %487 = vmatprep.subr.bf16.mxu0 0
        %488 = vmatpush2.bf16.msra.mxu0 0
        %489 = vmatprep.subr.bf16.mxu0 0
        %490 = vmatpush2.bf16.msra.mxu0 0
        %491 = vmatprep.subr.bf16.mxu0 0
        %492 = vmatpush2.bf16.msra.mxu0 0
        %493 = vmatprep.mubr.bf16.mxu0 0
        %494 = vmatmul.mubr.bf16.gmra.mxu0 %v418
        %v495 = vpop.f32.mrf.mxu0
        %v496 = vadd.f32 0.0, %v495
        %v497 = vpop.f32.mrf.mxu0
        %v498 = vadd.f32 0.0, %v497
        %v499 = vpop.f32.mrf.mxu0
        %v500 = vpop.f32.mrf.mxu0
        %501 = vdwg.mxu0
        %v502 = vmax.f32 %v455, 0.0
        %v503 = vmax.f32 %v457, 0.0
        %v504 = vmax.f32 %v496, 0.0
        %v505 = vmax.f32 %v498, 0.0
        %v506 = vadd.f32 %v502, %v503
        %v507 = vadd.f32 %v506, %v504
        %v508 = vadd.f32 %v507, %v505
        %509 = vadd.xlane.f32.xlu0 %v508
        %v510 = vpop.xlane.xlu0 %509
        %v511 = vmul.f32 %v510, 0.001953125
        %v513 = vrot.slane %v511, 4
        %v515 = vadd.f32 %v511, %v513
        %v516 = vld [vmem:[%s2] sm:$0xff]
        %v517 = vld [vmem:[%s2 + $0x8] sm:$0xff]
        %v518 = vld [vmem:[%s2 + $0x10] sm:$0xff]
        %v519 = vld [vmem:[%s2 + $0x18] sm:$0xff]
        %v520 = vld [vmem:[%s2 + $0x20] sm:$0xff]
        %525 = vrot.lane.b32.xlu0 %v516, 124
        %v526 = vpop.permute.xlu0 %525
        %527 = vrot.lane.b32.xlu0 %v517, 124
        %v528 = vpop.permute.xlu0 %527
        %529 = vrot.lane.b32.xlu0 %v518, 124
        %v530 = vpop.permute.xlu0 %529
        %531 = vrot.lane.b32.xlu0 %v519, 124
        %v532 = vpop.permute.xlu0 %531
        %vm537 = vcmask 31744
        %v538 = vsel %vm537, %v516, 0
        %v540 = vsel %vm537, %v517, 0
        %v542 = vsel %vm537, %v518, 0
        %v544 = vsel %vm537, %v519, 0
        %vm546 = vcmask 1043456
        %v548 = vsel %vm546, %v515, 0
        %550 = vmatprep.subr.mxu0 0.0
        %551 = vmatpush1.msra.mxu0 0.0
        %552 = vmatprep.subr.mxu0 0.0
        %553 = vmatpush1.msra.mxu0 0.0
        %554 = vmatprep.subr.mxu0 0.0
        %555 = vmatpush1.msra.mxu0 0.0
        %556 = vmatprep.subr.mxu0 0.0
        %557 = vmatpush1.msra.mxu0 0.0
        %558 = vmatprep.subr.mxu0 0.0
        %559 = vmatpush1.msra.mxu0 0.0
        %560 = vmatprep.subr.mxu0 0.0
        %561 = vmatpush1.msra.mxu0 0.0
        %562 = vmatprep.subr.mxu0 0.0
        %563 = vmatpush1.msra.mxu0 0.0
        %564 = vmatprep.subr.mxu0 0.0
        %565 = vmatpush1.msra.mxu0 0.0
        %566 = vmatprep.subr.mxu0 0.0
        %567 = vmatpush1.msra.mxu0 0.0
        %568 = vmatprep.subr.mxu0 0.0
        %569 = vmatpush1.msra.mxu0 0.0
        %570 = vmatprep.subr.mxu0 0.0
        %571 = vmatpush1.msra.mxu0 0.0
        %572 = vmatprep.subr.mxu0 0.0
        %573 = vmatpush1.msra.mxu0 0.0
        %574 = vmatprep.subr.mxu0 0.0
        %575 = vmatpush1.msra.mxu0 0.0
        %576 = vmatprep.subr.mxu0 0.0
        %577 = vmatpush1.msra.mxu0 0.0
        %578 = vmatprep.subr.mxu0 0.0
        %579 = vmatpush1.msra.mxu0 0.0
        %580 = vmatprep.subr.mxu0 0.0
        %581 = vmatpush1.msra.mxu0 %v548
        %582 = vmatprep.subr.mxu0 0.0
        %583 = vmatpush2.msra.mxu0 0.0
        %584 = vmatprep.subr.mxu0 0.0
        %585 = vmatpush2.msra.mxu0 0.0
        %586 = vmatprep.subr.mxu0 0.0
        %587 = vmatpush2.msra.mxu0 0.0
        %588 = vmatprep.subr.mxu0 0.0
        %589 = vmatpush2.msra.mxu0 0.0
        %590 = vmatprep.subr.mxu0 0.0
        %591 = vmatpush2.msra.mxu0 0.0
        %592 = vmatprep.subr.mxu0 0.0
        %593 = vmatpush2.msra.mxu0 0.0
        %594 = vmatprep.subr.mxu0 0.0
        %595 = vmatpush2.msra.mxu0 0.0
        %596 = vmatprep.subr.mxu0 0.0
        %597 = vmatpush2.msra.mxu0 0.0
        %598 = vmatprep.subr.mxu0 0.0
        %599 = vmatpush2.msra.mxu0 0.0
        %600 = vmatprep.subr.mxu0 0.0
        %601 = vmatpush2.msra.mxu0 0.0
        %602 = vmatprep.subr.mxu0 0.0
        %603 = vmatpush2.msra.mxu0 0.0
        %604 = vmatprep.subr.mxu0 0.0
        %605 = vmatpush2.msra.mxu0 0.0
        %606 = vmatprep.subr.mxu0 0.0
        %607 = vmatpush2.msra.mxu0 0.0
        %608 = vmatprep.subr.mxu0 0.0
        %609 = vmatpush2.msra.mxu0 0.0
        %610 = vmatprep.subr.mxu0 0.0
        %611 = vmatpush2.msra.mxu0 0.0
        %612 = vmatprep.subr.mxu0 0.0
        %613 = vmatpush2.msra.mxu0 0.0
        %614 = vmatprep.mubr.f32.mxu0 0.0
        %615 = vmatmul.mubr.f32.gmra.mxu0 %v538
        %v616 = vpop.f32.mrf.mxu0
        %v617 = vadd.f32 %v526, %v616
        %v618 = vpop.f32.mrf.mxu0
        %619 = vmatprep.mubr.f32.mxu0 0.0
        %620 = vmatmul.mubr.f32.gmra.mxu0 %v540
        %v621 = vpop.f32.mrf.mxu0
        %v622 = vadd.f32 %v528, %v621
        %v623 = vpop.f32.mrf.mxu0
        %624 = vmatprep.mubr.f32.mxu0 0.0
        %625 = vmatmul.mubr.f32.gmra.mxu0 %v542
        %v626 = vpop.f32.mrf.mxu0
        %v627 = vadd.f32 %v530, %v626
        %v628 = vpop.f32.mrf.mxu0
        %629 = vmatprep.mubr.f32.mxu0 0.0
        %630 = vmatmul.mubr.f32.gmra.mxu0 %v544
        %v631 = vpop.f32.mrf.mxu0
        %v632 = vadd.f32 %v532, %v631
        %v633 = vpop.f32.mrf.mxu0
        %634 = vdwg.mxu0
        %v635 = vmax.f32 %v617, 0.0
        %v636 = vmax.f32 %v622, 0.0
        %v637 = vmax.f32 %v627, 0.0
        %v638 = vmax.f32 %v632, 0.0
        %640 = vrot.lane.b32.xlu0 %v520, 96
        %v641 = vpop.permute.xlu0 %640
        %vm643 = vcmask 261120
        %v644 = vsel %vm643, %v520, 0
        %646 = vmatprep.subr.mxu0 0.0
        %647 = vmatpush1.msra.mxu0 0.0
        %648 = vmatprep.subr.mxu0 0.0
        %649 = vmatpush1.msra.mxu0 0.0
        %650 = vmatprep.subr.mxu0 0.0
        %651 = vmatpush1.msra.mxu0 0.0
        %652 = vmatprep.subr.mxu0 0.0
        %653 = vmatpush1.msra.mxu0 0.0
        %654 = vmatprep.subr.mxu0 0.0
        %655 = vmatpush1.msra.mxu0 0.0
        %656 = vmatprep.subr.mxu0 0.0
        %657 = vmatpush1.msra.mxu0 0.0
        %658 = vmatprep.subr.mxu0 0.0
        %659 = vmatpush1.msra.mxu0 0.0
        %660 = vmatprep.subr.mxu0 0.0
        %661 = vmatpush1.msra.mxu0 0.0
        %662 = vmatprep.subr.mxu0 0.0
        %663 = vmatpush1.msra.mxu0 0.0
        %664 = vmatprep.subr.mxu0 0.0
        %665 = vmatpush1.msra.mxu0 0.0
        %666 = vmatprep.subr.mxu0 0.0
        %667 = vmatpush1.msra.mxu0 0.0
        %668 = vmatprep.subr.mxu0 0.0
        %669 = vmatpush1.msra.mxu0 0.0
        %670 = vmatprep.subr.mxu0 0.0
        %671 = vmatpush1.msra.mxu0 %v638
        %672 = vmatprep.subr.mxu0 0.0
        %673 = vmatpush1.msra.mxu0 %v637
        %674 = vmatprep.subr.mxu0 0.0
        %675 = vmatpush1.msra.mxu0 %v636
        %676 = vmatprep.subr.mxu0 0.0
        %677 = vmatpush1.msra.mxu0 %v635
        %678 = vmatprep.subr.mxu0 0.0
        %679 = vmatpush2.msra.mxu0 0.0
        %680 = vmatprep.subr.mxu0 0.0
        %681 = vmatpush2.msra.mxu0 0.0
        %682 = vmatprep.subr.mxu0 0.0
        %683 = vmatpush2.msra.mxu0 0.0
        %684 = vmatprep.subr.mxu0 0.0
        %685 = vmatpush2.msra.mxu0 0.0
        %686 = vmatprep.subr.mxu0 0.0
        %687 = vmatpush2.msra.mxu0 0.0
        %688 = vmatprep.subr.mxu0 0.0
        %689 = vmatpush2.msra.mxu0 0.0
        %690 = vmatprep.subr.mxu0 0.0
        %691 = vmatpush2.msra.mxu0 0.0
        %692 = vmatprep.subr.mxu0 0.0
        %693 = vmatpush2.msra.mxu0 0.0
        %694 = vmatprep.subr.mxu0 0.0
        %695 = vmatpush2.msra.mxu0 0.0
        %696 = vmatprep.subr.mxu0 0.0
        %697 = vmatpush2.msra.mxu0 0.0
        %698 = vmatprep.subr.mxu0 0.0
        %699 = vmatpush2.msra.mxu0 0.0
        %700 = vmatprep.subr.mxu0 0.0
        %701 = vmatpush2.msra.mxu0 0.0
        %702 = vmatprep.subr.mxu0 0.0
        %703 = vmatpush2.msra.mxu0 0.0
        %704 = vmatprep.subr.mxu0 0.0
        %705 = vmatpush2.msra.mxu0 0.0
        %706 = vmatprep.subr.mxu0 0.0
        %707 = vmatpush2.msra.mxu0 0.0
        %708 = vmatprep.subr.mxu0 0.0
        %709 = vmatpush2.msra.mxu0 0.0
        %710 = vmatprep.mubr.f32.mxu0 0.0
        %711 = vmatmul.mubr.f32.gmra.mxu0 %v644
        %v712 = vpop.f32.mrf.mxu0
        %v713 = vadd.f32 %v641, %v712
        %v714 = vpop.f32.mrf.mxu0
        %715 = vdwg.mxu0
        %v717 = vrot.slane %v713, 4
        %v719 = vmax.f32 %v713, %v717
        %v720 = vsub.f32 %v713, %v719
        %v721 = vmul.f32 %v720, 1.442695
        %v722 = vpow.pop %v721
        %v724 = vrot.slane %v719, 4
        %v726 = vsub.f32 %v713, %v724
        %v727 = vmul.f32 %v726, 1.442695
        %v728 = vpow.pop %v727
        %v730 = vrot.slane %v728, 4
        %v732 = vadd.f32 %v722, %v730
        %v733 = vrcp.pop %v732
        %v734 = vmul.f32 %v722, %v733
        %v736 = vrot.slane %v732, 4
        %v738 = vrcp.pop %v736
        %v739 = vmul.f32 %v728, %v738
        %741 = vset.pattern.permute.xlu0 0
        %742 = vperm.xlu0 %741, %v734
        %v743 = vpop.permute.xlu0 %742
        %v745 = vmul.f32 %v502, %v743
        %v746 = vmul.f32 %v503, %v743
        %v747 = vmul.f32 %v504, %v743
        %v748 = vmul.f32 %v505, %v743
        %750 = vset.pattern.permute.xlu0 0
        %751 = vperm.xlu0 %750, %v739
        %v752 = vpop.permute.xlu0 %751
        %v754 = vmul.f32 %v502, %v752
        %v755 = vmul.f32 %v503, %v752
        %v756 = vmul.f32 %v504, %v752
        %v757 = vmul.f32 %v505, %v752
        %v762 = vrot.slane %v754, 4
        %v763 = vrot.slane %v755, 4
        %v764 = vrot.slane %v756, 4
        %v765 = vrot.slane %v757, 4
        %v770 = vadd.f32 %v745, %v762
        %v771 = vadd.f32 %v746, %v763
        %v772 = vadd.f32 %v747, %v764
        %v773 = vadd.f32 %v748, %v765
        %v778 = vcombine.low %v770, %v771
        %v779 = vcombine.low %v772, %v773
        %782 = vst [vmem:[%s245] sm:$0xff] %v778
        %783 = vst [vmem:[%s245 + $0x8] sm:$0xff] %v779
        %p784 = scmp.lt.s32.totalorder %s14, 1
        %s785 = scalar_select %p784, %s14, 1
        %s786 = smul.addr %s785, 4
        %s787 = smul.addr %s786, 4
        %s788 = scalar_lea.vmem %s3, %s787
        // Predicated region
        $region56: #{splat_conv3d.1} parent=50 // pred_check
          %p789 = pneg %p100
        $region57: #{splat_conv3d.1} parent=50 // pred_check_branch
          %791 = sbr.rel (%p789) target = $region59
        $region58: #{splat_conv3d.1} parent=50 // pred_region
          _
        $region59: #{splat_conv3d.1} parent=50 // pred_fallthru
          _
      $region51: #{splat_conv3d.1} parent=5 // pred_fallthru
        _
      %p792 = scmp.le.s32.totalorder 2, %s9
      // Predicated region
      $region60: #{splat_conv3d.1} parent=5 // pred_check
        %p793 = pneg %p792
      $region61: #{splat_conv3d.1} parent=5 // pred_check_branch
        %795 = sbr.rel (%p793) target = $region63
      $region62: #{splat_conv3d.1} parent=5 // pred_region
        %s796 = ssub.s32 %s9, 2
        // Predicated region
        $region64: #{splat_conv3d.1} parent=62 // pred_check
          %p797 = pneg %p106
        $region65: #{splat_conv3d.1} parent=62 // pred_check_branch
          %799 = sbr.rel (%p797) target = $region67
        $region66: #{splat_conv3d.1} parent=62 // pred_region
          %p800 = scmp.lt.s32.totalorder %s15, 1
          %s801 = scalar_select %p800, %s15, 1
          %s802 = smul.addr %s801, 4
          %s803 = smul.addr %s802, 4
          %s804 = scalar_lea.vmem %s3, %s803
        $region67: #{splat_conv3d.1} parent=62 // pred_fallthru
          _
      $region63: #{splat_conv3d.1} parent=5 // pred_fallthru
        _
    $region6: #{splat_conv3d.1} parent=1 // loop_footer
      %s13 = sadd.s32 1, %s9
    $region7: #{splat_conv3d.1} parent=1 // loop_footer_branch
      %8 = sbr.rel target = $region3
    $region8: #{splat_conv3d.1} parent=1 // loop_exit
      _

</llo_original>
